<compile_context>
chip_gen: v7x
topology: tpu7x:2x2x1
jax: 0.10.0
libtpu: 0.0.40
codegen_flags: <defaults>
</compile_context>

<pallas_src>
import jax
import jax.numpy as jnp
from jax.experimental import pallas as pl
from jax.experimental.pallas import tpu as pltpu


def _round_up(n, m):
    return ((n + m - 1) // m) * m


def _pick_batch_tile(batch):
    """Pick a batch tile: big enough to fill the MXU, small enough to keep
    >=2 parallel grid steps (v7x megacore) and stay trivially inside VMEM."""
    b8 = _round_up(batch, 8)          # f32/bf16 sublane multiple
    if b8 >= 1024:
        return 512                    # grid >= 2, 512x128 tiles ~ fractions of a MiB
    if b8 >= 16:
        return _round_up((b8 + 1) // 2, 8)   # two grid steps
    return b8                         # tiny batch: single step


def _dqn_mlp_kernel(x_ref,
                    w1_ref, b1_ref,
                    w2_ref, b2_ref,
                    w3_ref, b3_ref,
                    w4_ref, b4_ref,
                    o_ref):
    """Whole MLP for one batch tile, fused in VMEM.

    Matmuls run on the MXU with bf16 inputs and f32 accumulation; ReLU + bias
    run on the VPU in f32; activations are re-cast to bf16 between layers."""
    x = x_ref[...]                                            # (tile, K1) bf16

    h = jnp.dot(x, w1_ref[...], preferred_element_type=jnp.float32) + b1_ref[...]
    h = jnp.maximum(h, 0.0).astype(jnp.bfloat16)

    h = jnp.dot(h, w2_ref[...], preferred_element_type=jnp.float32) + b2_ref[...]
    h = jnp.maximum(h, 0.0).astype(jnp.bfloat16)

    h = jnp.dot(h, w3_ref[...], preferred_element_type=jnp.float32) + b3_ref[...]
    h = jnp.maximum(h, 0.0).astype(jnp.bfloat16)

    out = jnp.dot(h, w4_ref[...], preferred_element_type=jnp.float32) + b4_ref[...]
    o_ref[...] = out.astype(o_ref.dtype)                      # (tile, 128) lane-dense


def dqn_forward(x, params, *, batch_tile=None):
    """Run the fused DQN MLP Pallas kernel.

    x:       (B, input_dim) float32
    params:  dict with w1,b1,w2,b2,w3,b3,w4,b4
             weights (in, out) float32, biases (1, out) float32
    """
    w1, b1 = params["w1"], params["b1"]
    w2, b2 = params["w2"], params["b2"]
    w3, b3 = params["w3"], params["b3"]
    w4, b4 = params["w4"], params["b4"]

    B, d_in = x.shape
    d_out = w4.shape[1]
    h3 = w4.shape[0]                      # 64

    # --- padding for MXU / lane alignment -----------------------------------
    k1 = _round_up(d_in, 128)             # first-layer contraction dim
    n_out = _round_up(d_out, 128)         # lane-dense output width

    tile = batch_tile if batch_tile is not None else _pick_batch_tile(B)
    tile = _round_up(max(tile, 8), 8)
    b_pad = _round_up(B, tile)

    # --- cast / pad operands at the pallas_call boundary --------------------
    x_p = jnp.pad(x, ((0, b_pad - B), (0, k1 - d_in))).astype(jnp.bfloat16)

    w1_p = jnp.pad(w1, ((0, k1 - d_in), (0, 0))).astype(jnp.bfloat16)
    w2_p = w2.astype(jnp.bfloat16)
    w3_p = w3.astype(jnp.bfloat16)
    w4_p = jnp.pad(w4, ((0, 0), (0, n_out - d_out))).astype(jnp.bfloat16)

    b1_p = b1.astype(jnp.float32)
    b2_p = b2.astype(jnp.float32)
    b3_p = b3.astype(jnp.float32)
    b4_p = jnp.pad(b4, ((0, 0), (0, n_out - d_out))).astype(jnp.float32)

    # Weights/biases are tiny (~115 KiB total) -> keep each as a single full
    # block resident in VMEM; only the batch axis is tiled.
    full = lambda a: pl.BlockSpec(a.shape, lambda i: (0,) * a.ndim)

    grid = (b_pad // tile,)
    out_padded = pl.pallas_call(
        _dqn_mlp_kernel,
        out_shape=jax.ShapeDtypeStruct((b_pad, n_out), jnp.float32),
        grid_spec=pltpu.PrefetchScalarGridSpec(
            num_scalar_prefetch=0,
            grid=grid,
            in_specs=[
                pl.BlockSpec((tile, k1), lambda i: (i, 0)),
                full(w1_p), full(b1_p),
                full(w2_p), full(b2_p),
                full(w3_p), full(b3_p),
                full(w4_p), full(b4_p),
            ],
            out_specs=pl.BlockSpec((tile, n_out), lambda i: (i, 0)),
        ),
        compiler_params=pltpu.CompilerParams(
            dimension_semantics=("parallel",),
        ),
    )(x_p, w1_p, b1_p, w2_p, b2_p, w3_p, b3_p, w4_p, b4_p)

    # Slice back to the logical (B, output_dim); slice is free vs. the kernel.
    return out_padded[:B, :d_out]


def init_params(key, input_dim, output_dim):
    """Deterministic synthetic parameters (PyTorch-Linear shaped, stored (in, out))."""
    dims = [(input_dim, 128), (128, 128), (128, 64), (64, output_dim)]
    params = {}
    for idx, (din, dout) in enumerate(dims, start=1):
        key, kw, kb = jax.random.split(key, 3)
        bound = 1.0 / jnp.sqrt(din)  # matches nn.Linear default U(-1/sqrt(in), 1/sqrt(in))
        params[f"w{idx}"] = jax.random.uniform(
            kw, (din, dout), jnp.float32, minval=-bound, maxval=bound)
        params[f"b{idx}"] = jax.random.uniform(
            kb, (1, dout), jnp.float32, minval=-bound, maxval=bound)
    return params


def reference_forward(x, p, *, match_bf16=True):
    """Pure-JAX reference of the same MLP.

    With match_bf16=True it applies the same bf16 input rounding as the kernel
    (f32 accumulation), so the comparison isolates kernel bugs from the
    expected bf16 quantization of matmul inputs."""
    cast = (lambda a: a.astype(jnp.bfloat16)) if match_bf16 else (lambda a: a)
    h = x
    for i in (1, 2, 3):
        h = jnp.dot(cast(h), cast(p[f"w{i}"]),
                    preferred_element_type=jnp.float32) + p[f"b{i}"]
        h = jnp.maximum(h, 0.0)
    return jnp.dot(cast(h), cast(p["w4"]),
                   preferred_element_type=jnp.float32) + p["b4"]


if __name__ == "__main__":
    key = jax.random.PRNGKey(0)
    k_params, k_x = jax.random.split(key)

    batch = 8
    input_dim = 32   # e.g. a flattened observation vector
    output_dim = 4   # number of discrete actions

    params = init_params(k_params, input_dim, output_dim)
    x = jax.random.normal(k_x, (batch, input_dim), jnp.float32)

    out = dqn_forward(x, params)
    out = jax.block_until_ready(out)

    ref_bf16 = reference_forward(x, params, match_bf16=True)
    ref_f32 = reference_forward(x, params, match_bf16=False)

    assert out.shape == (batch, output_dim)
    assert jnp.allclose(out, ref_bf16, atol=2e-2, rtol=2e-2), "mismatch vs bf16 reference"
    assert jnp.allclose(out, ref_f32, atol=5e-2, rtol=5e-2), "mismatch vs f32 reference"

    print("KERNEL_OK")
</pallas_src>

<mosaic_0001>
module attributes {stable_mosaic.version = 11 : i64} {
  func.func @_dqn_mlp_kernel(%arg0: i32, %arg1: memref<8x128xbf16, #tpu.memory_space<vmem>>, %arg2: memref<128x128xbf16, #tpu.memory_space<vmem>>, %arg3: memref<1x128xf32, #tpu.memory_space<vmem>>, %arg4: memref<128x128xbf16, #tpu.memory_space<vmem>>, %arg5: memref<1x128xf32, #tpu.memory_space<vmem>>, %arg6: memref<128x64xbf16, #tpu.memory_space<vmem>>, %arg7: memref<1x64xf32, #tpu.memory_space<vmem>>, %arg8: memref<64x128xbf16, #tpu.memory_space<vmem>>, %arg9: memref<1x128xf32, #tpu.memory_space<vmem>>, %arg10: memref<8x128xf32, #tpu.memory_space<vmem>>) attributes {dimension_semantics = [#tpu.dimension_semantics<parallel>], iteration_bounds = array<i64: 1>, scalar_prefetch = 0 : i64, scratch_operands = 0 : i64, tpu.core_type = #tpu.core_type<tc>, window_params = [{transform_indices = @transform_0, window_bounds = array<i64: 8, 128>}, {pipeline_mode = #tpu.pipeline_mode<synchronous>, transform_indices = @transform_1, window_bounds = array<i64: 128, 128>}, {pipeline_mode = #tpu.pipeline_mode<synchronous>, transform_indices = @transform_2, window_bounds = array<i64: 1, 128>}, {pipeline_mode = #tpu.pipeline_mode<synchronous>, transform_indices = @transform_3, window_bounds = array<i64: 128, 128>}, {pipeline_mode = #tpu.pipeline_mode<synchronous>, transform_indices = @transform_4, window_bounds = array<i64: 1, 128>}, {pipeline_mode = #tpu.pipeline_mode<synchronous>, transform_indices = @transform_5, window_bounds = array<i64: 128, 64>}, {pipeline_mode = #tpu.pipeline_mode<synchronous>, transform_indices = @transform_6, window_bounds = array<i64: 1, 64>}, {pipeline_mode = #tpu.pipeline_mode<synchronous>, transform_indices = @transform_7, window_bounds = array<i64: 64, 128>}, {pipeline_mode = #tpu.pipeline_mode<synchronous>, transform_indices = @transform_8, window_bounds = array<i64: 1, 128>}, {transform_indices = @transform_9, window_bounds = array<i64: 8, 128>}]} {
    %c0 = arith.constant 0 : index
    %c0_0 = arith.constant 0 : index
    %0 = vector.load %arg1[%c0, %c0_0] : memref<8x128xbf16, #tpu.memory_space<vmem>>, vector<8x128xbf16>
    %c0_1 = arith.constant 0 : index
    %c0_2 = arith.constant 0 : index
    %1 = vector.load %arg2[%c0_1, %c0_2] : memref<128x128xbf16, #tpu.memory_space<vmem>>, vector<128x128xbf16>
    %cst = arith.constant dense<0.000000e+00> : vector<8x128xf32>
    %2 = tpu.matmul %0, %1, %cst {dimension_numbers = #tpu.dot_dimension_numbers<[1], [0], [0], [1], [0, 0, 1, 1], [], []>} : vector<8x128xbf16>, vector<128x128xbf16>, vector<8x128xf32> -> vector<8x128xf32>
    %c0_3 = arith.constant 0 : index
    %c0_4 = arith.constant 0 : index
    %3 = vector.load %arg3[%c0_3, %c0_4] : memref<1x128xf32, #tpu.memory_space<vmem>>, vector<1x128xf32>
    %4 = vector.broadcast %3 : vector<1x128xf32> to vector<8x128xf32>
    %5 = arith.addf %2, %4 : vector<8x128xf32>
    %cst_5 = arith.constant 0.000000e+00 : f32
    %6 = vector.broadcast %cst_5 : f32 to vector<8x128xf32>
    %7 = arith.maximumf %5, %6 : vector<8x128xf32>
    %8 = arith.truncf %7 : vector<8x128xf32> to vector<8x128xbf16>
    %c0_6 = arith.constant 0 : index
    %c0_7 = arith.constant 0 : index
    %9 = vector.load %arg4[%c0_6, %c0_7] : memref<128x128xbf16, #tpu.memory_space<vmem>>, vector<128x128xbf16>
    %cst_8 = arith.constant dense<0.000000e+00> : vector<8x128xf32>
    %10 = tpu.matmul %8, %9, %cst_8 {dimension_numbers = #tpu.dot_dimension_numbers<[1], [0], [0], [1], [0, 0, 1, 1], [], []>} : vector<8x128xbf16>, vector<128x128xbf16>, vector<8x128xf32> -> vector<8x128xf32>
    %c0_9 = arith.constant 0 : index
    %c0_10 = arith.constant 0 : index
    %11 = vector.load %arg5[%c0_9, %c0_10] : memref<1x128xf32, #tpu.memory_space<vmem>>, vector<1x128xf32>
    %12 = vector.broadcast %11 : vector<1x128xf32> to vector<8x128xf32>
    %13 = arith.addf %10, %12 : vector<8x128xf32>
    %cst_11 = arith.constant 0.000000e+00 : f32
    %14 = vector.broadcast %cst_11 : f32 to vector<8x128xf32>
    %15 = arith.maximumf %13, %14 : vector<8x128xf32>
    %16 = arith.truncf %15 : vector<8x128xf32> to vector<8x128xbf16>
    %c0_12 = arith.constant 0 : index
    %c0_13 = arith.constant 0 : index
    %17 = vector.load %arg6[%c0_12, %c0_13] : memref<128x64xbf16, #tpu.memory_space<vmem>>, vector<128x64xbf16>
    %cst_14 = arith.constant dense<0.000000e+00> : vector<8x64xf32>
    %18 = tpu.matmul %16, %17, %cst_14 {dimension_numbers = #tpu.dot_dimension_numbers<[1], [0], [0], [1], [0, 0, 1, 1], [], []>} : vector<8x128xbf16>, vector<128x64xbf16>, vector<8x64xf32> -> vector<8x64xf32>
    %c0_15 = arith.constant 0 : index
    %c0_16 = arith.constant 0 : index
    %19 = vector.load %arg7[%c0_15, %c0_16] : memref<1x64xf32, #tpu.memory_space<vmem>>, vector<1x64xf32>
    %20 = vector.broadcast %19 : vector<1x64xf32> to vector<8x64xf32>
    %21 = arith.addf %18, %20 : vector<8x64xf32>
    %cst_17 = arith.constant 0.000000e+00 : f32
    %22 = vector.broadcast %cst_17 : f32 to vector<8x64xf32>
    %23 = arith.maximumf %21, %22 : vector<8x64xf32>
    %24 = arith.truncf %23 : vector<8x64xf32> to vector<8x64xbf16>
    %c0_18 = arith.constant 0 : index
    %c0_19 = arith.constant 0 : index
    %25 = vector.load %arg8[%c0_18, %c0_19] : memref<64x128xbf16, #tpu.memory_space<vmem>>, vector<64x128xbf16>
    %cst_20 = arith.constant dense<0.000000e+00> : vector<8x128xf32>
    %26 = tpu.matmul %24, %25, %cst_20 {dimension_numbers = #tpu.dot_dimension_numbers<[1], [0], [0], [1], [0, 0, 1, 1], [], []>} : vector<8x64xbf16>, vector<64x128xbf16>, vector<8x128xf32> -> vector<8x128xf32>
    %c0_21 = arith.constant 0 : index
    %c0_22 = arith.constant 0 : index
    %27 = vector.load %arg9[%c0_21, %c0_22] : memref<1x128xf32, #tpu.memory_space<vmem>>, vector<1x128xf32>
    %28 = vector.broadcast %27 : vector<1x128xf32> to vector<8x128xf32>
    %29 = arith.addf %26, %28 : vector<8x128xf32>
    %c0_23 = arith.constant 0 : index
    %c0_24 = arith.constant 0 : index
    %30 = vector.load %arg10[%c0_23, %c0_24] : memref<8x128xf32, #tpu.memory_space<vmem>>, vector<8x128xf32>
    tpu.vector_store %arg10[%c0_23, %c0_24], %29 {strides = array<i32>} : memref<8x128xf32, #tpu.memory_space<vmem>>, vector<8x128xf32>,
    return
  }
  func.func @transform_0(%arg0: i32) -> (i32, i32) {
    %c0_i32 = arith.constant 0 : i32
    %c0_i32_0 = arith.constant 0 : i32
    return %arg0, %c0_i32 : i32, i32
  }
  func.func @transform_1(%arg0: i32) -> (i32, i32) {
    %c0_i32 = arith.constant 0 : i32
    %c0_i32_0 = arith.constant 0 : i32
    %c0_i32_1 = arith.constant 0 : i32
    return %c0_i32, %c0_i32_0 : i32, i32
  }
  func.func @transform_2(%arg0: i32) -> (i32, i32) {
    %c0_i32 = arith.constant 0 : i32
    %c0_i32_0 = arith.constant 0 : i32
    %c0_i32_1 = arith.constant 0 : i32
    return %c0_i32, %c0_i32_0 : i32, i32
  }
  func.func @transform_3(%arg0: i32) -> (i32, i32) {
    %c0_i32 = arith.constant 0 : i32
    %c0_i32_0 = arith.constant 0 : i32
    %c0_i32_1 = arith.constant 0 : i32
    return %c0_i32, %c0_i32_0 : i32, i32
  }
  func.func @transform_4(%arg0: i32) -> (i32, i32) {
    %c0_i32 = arith.constant 0 : i32
    %c0_i32_0 = arith.constant 0 : i32
    %c0_i32_1 = arith.constant 0 : i32
    return %c0_i32, %c0_i32_0 : i32, i32
  }
  func.func @transform_5(%arg0: i32) -> (i32, i32) {
    %c0_i32 = arith.constant 0 : i32
    %c0_i32_0 = arith.constant 0 : i32
    %c0_i32_1 = arith.constant 0 : i32
    return %c0_i32, %c0_i32_0 : i32, i32
  }
  func.func @transform_6(%arg0: i32) -> (i32, i32) {
    %c0_i32 = arith.constant 0 : i32
    %c0_i32_0 = arith.constant 0 : i32
    %c0_i32_1 = arith.constant 0 : i32
    return %c0_i32, %c0_i32_0 : i32, i32
  }
  func.func @transform_7(%arg0: i32) -> (i32, i32) {
    %c0_i32 = arith.constant 0 : i32
    %c0_i32_0 = arith.constant 0 : i32
    %c0_i32_1 = arith.constant 0 : i32
    return %c0_i32, %c0_i32_0 : i32, i32
  }
  func.func @transform_8(%arg0: i32) -> (i32, i32) {
    %c0_i32 = arith.constant 0 : i32
    %c0_i32_0 = arith.constant 0 : i32
    %c0_i32_1 = arith.constant 0 : i32
    return %c0_i32, %c0_i32_0 : i32, i32
  }
  func.func @transform_9(%arg0: i32) -> (i32, i32) {
    %c0_i32 = arith.constant 0 : i32
    %c0_i32_0 = arith.constant 0 : i32
    return %arg0, %c0_i32 : i32, i32
  }
}

</mosaic_0001>

<llo_original>
// kernel: tpu_custom_call.1
$region0: #{tpu_custom_call.1}
  #allocation0 [shape = 'u32[]', space=smem, size = 0x4, offset = 0x4, fixed_abs, tag = 'smem constant byte address 0x4 - core index']
  #allocation1 [shape = 'u32[144,128]{1,0:T(1,128)}', space=vmem, size = 0x12000, scoped, tag = 'internal scratch']
  %s0 = inlined_call_operand.hbm [shape: bf16[8,128], index: 0, kind: input, shape index: {}]
  %s1 = inlined_call_operand.vmem [shape: bf16[128,128], index: 1, kind: input, shape index: {}]
  %s2 = inlined_call_operand.vmem [shape: f32[1,128], index: 2, kind: input, shape index: {}]
  %s3 = inlined_call_operand.hbm [shape: bf16[128,128], index: 3, kind: input, shape index: {}]
  %s4 = inlined_call_operand.vmem [shape: f32[1,128], index: 4, kind: input, shape index: {}]
  %s5 = inlined_call_operand.vmem [shape: bf16[128,64], index: 5, kind: input, shape index: {}]
  %s6 = inlined_call_operand.vmem [shape: f32[1,64], index: 6, kind: input, shape index: {}]
  %s7 = inlined_call_operand.vmem [shape: bf16[64,128], index: 7, kind: input, shape index: {}]
  %s8 = inlined_call_operand.vmem [shape: f32[1,128], index: 8, kind: input, shape index: {}]
  %s9 = inlined_call_operand.hbm [shape: f32[8,128], index: 9, kind: output, shape index: {}]
  %s10 = sld [smem:[#allocation0]]
  $region54: #{tpu_custom_call.1} parent=0
    _
  %s12 = ssub.s32 1, %s10
  %s13 = scalar_select 0, %s12, %s10
  $region1: #{tpu_custom_call.1} parent=0
    #allocation2 [shape = 'u8[2048]{0}', space=vmem, size = 0x800, scoped, tag = 'input window, operand 0, single buffered']
    #allocation3 [shape = 's32[1]{0}', space=sflag, size = 0x4, scoped, tag = 'scoped memory for tpu_custom_call.1']
    #allocation4 [shape = 's32[1]{0}', space=sflag, size = 0x4, scoped, tag = 'scoped memory for tpu_custom_call.1']
    #allocation5 [shape = 'u8[32768]{0}', space=vmem, size = 0x8000, scoped, tag = 'input window, operand 3, single buffered']
    #allocation6 [shape = 's32[1]{0}', space=sflag, size = 0x4, scoped, tag = 'scoped memory for tpu_custom_call.1']
    #allocation7 [shape = 'u8[4096]{0}', space=vmem, size = 0x1000, scoped, tag = 'output window, operand 0, single buffered']
    %14 = vsyncpa [#allocation3], 0
    %15 = vsyncpa [#allocation6], 0
    %16 = vsyncpa [#allocation4], 0
    // Predicated region
    $region2: #{tpu_custom_call.1} parent=1 // pred_check
      _
    $region3: #{tpu_custom_call.1} parent=1 // pred_check_branch
      %18 = sbr.rel (0) target = $region5
    $region4: #{tpu_custom_call.1} parent=1 // pred_region
      %s20 = ssub.s32 64, 64
      %21 = vsyncadd [#allocation3], %s20
      %s23 = sshll.u32 [#allocation2], 4
      %s24 = int_to_ptr.vmem [resolvable:$true] %s23
      %26 = dma.hbm_to_vmem [thread:$0]  %s0, 64, %s24, [#allocation3]
    $region5: #{tpu_custom_call.1} parent=1 // pred_fallthru
      _
    // Predicated region
    $region6: #{tpu_custom_call.1} parent=1 // pred_check
      _
    $region7: #{tpu_custom_call.1} parent=1 // pred_check_branch
      %28 = sbr.rel (0) target = $region9
    $region8: #{tpu_custom_call.1} parent=1 // pred_region
      _
    $region9: #{tpu_custom_call.1} parent=1 // pred_fallthru
      _
    // Predicated region
    $region10: #{tpu_custom_call.1} parent=1 // pred_check
      _
    $region11: #{tpu_custom_call.1} parent=1 // pred_check_branch
      %30 = sbr.rel (0) target = $region13
    $region12: #{tpu_custom_call.1} parent=1 // pred_region
      _
    $region13: #{tpu_custom_call.1} parent=1 // pred_fallthru
      _
    // Predicated region
    $region14: #{tpu_custom_call.1} parent=1 // pred_check
      _
    $region15: #{tpu_custom_call.1} parent=1 // pred_check_branch
      %32 = sbr.rel (0) target = $region17
    $region16: #{tpu_custom_call.1} parent=1 // pred_region
      %s34 = ssub.s32 1024, 1024
      %35 = vsyncadd [#allocation6], %s34
      %s36 = sshll.u32 [#allocation5], 4
      %s37 = int_to_ptr.vmem [resolvable:$true] %s36
      %42 = dma.hbm_to_vmem [thread:$0]  %s3, 1024, %s37, [#allocation6], 64, 64, 4
    $region17: #{tpu_custom_call.1} parent=1 // pred_fallthru
      _
    // Predicated region
    $region18: #{tpu_custom_call.1} parent=1 // pred_check
      _
    $region19: #{tpu_custom_call.1} parent=1 // pred_check_branch
      %44 = sbr.rel (0) target = $region21
    $region20: #{tpu_custom_call.1} parent=1 // pred_region
      _
    $region21: #{tpu_custom_call.1} parent=1 // pred_fallthru
      _
    // Predicated region
    $region22: #{tpu_custom_call.1} parent=1 // pred_check
      _
    $region23: #{tpu_custom_call.1} parent=1 // pred_check_branch
      %46 = sbr.rel (0) target = $region25
    $region24: #{tpu_custom_call.1} parent=1 // pred_region
      _
    $region25: #{tpu_custom_call.1} parent=1 // pred_fallthru
      _
    // Predicated region
    $region26: #{tpu_custom_call.1} parent=1 // pred_check
      _
    $region27: #{tpu_custom_call.1} parent=1 // pred_check_branch
      %48 = sbr.rel (0) target = $region29
    $region28: #{tpu_custom_call.1} parent=1 // pred_region
      _
    $region29: #{tpu_custom_call.1} parent=1 // pred_fallthru
      _
    // Predicated region
    $region30: #{tpu_custom_call.1} parent=1 // pred_check
      _
    $region31: #{tpu_custom_call.1} parent=1 // pred_check_branch
      %50 = sbr.rel (0) target = $region33
    $region32: #{tpu_custom_call.1} parent=1 // pred_region
      _
    $region33: #{tpu_custom_call.1} parent=1 // pred_fallthru
      _
    // Predicated region
    $region34: #{tpu_custom_call.1} parent=1 // pred_check
      _
    $region35: #{tpu_custom_call.1} parent=1 // pred_check_branch
      %52 = sbr.rel (0) target = $region37
    $region36: #{tpu_custom_call.1} parent=1 // pred_region
      _
    $region37: #{tpu_custom_call.1} parent=1 // pred_fallthru
      _
    // Predicated region
    $region38: #{tpu_custom_call.1} parent=1 // pred_check
      _
    $region39: #{tpu_custom_call.1} parent=1 // pred_check_branch
      %54 = sbr.rel (0) target = $region41
    $region40: #{tpu_custom_call.1} parent=1 // pred_region
      %55 = dma.done [#allocation3], 64
    $region41: #{tpu_custom_call.1} parent=1 // pred_fallthru
      _
    // Predicated region
    $region42: #{tpu_custom_call.1} parent=1 // pred_check
      _
    $region43: #{tpu_custom_call.1} parent=1 // pred_check_branch
      %57 = sbr.rel (0) target = $region45
    $region44: #{tpu_custom_call.1} parent=1 // pred_region
      %58 = dma.done [#allocation6], 1024
    $region45: #{tpu_custom_call.1} parent=1 // pred_fallthru
      _
    %v60 = vld [vmem:[#allocation2] sm:$0xf]
    %v61 = vld [vmem:[%s1] sm:$0xf]
    %v62 = vld [vmem:[%s1 + $0x4] sm:$0xf]
    %v63 = vld [vmem:[%s1 + $0x8] sm:$0xf]
    %v64 = vld [vmem:[%s1 + $0xc] sm:$0xf]
    %v65 = vld [vmem:[%s1 + $0x10] sm:$0xf]
    %v66 = vld [vmem:[%s1 + $0x14] sm:$0xf]
    %v67 = vld [vmem:[%s1 + $0x18] sm:$0xf]
    %v68 = vld [vmem:[%s1 + $0x1c] sm:$0xf]
    %v69 = vld [vmem:[%s1 + $0x20] sm:$0xf]
    %v70 = vld [vmem:[%s1 + $0x24] sm:$0xf]
    %v71 = vld [vmem:[%s1 + $0x28] sm:$0xf]
    %v72 = vld [vmem:[%s1 + $0x2c] sm:$0xf]
    %v73 = vld [vmem:[%s1 + $0x30] sm:$0xf]
    %v74 = vld [vmem:[%s1 + $0x34] sm:$0xf]
    %v75 = vld [vmem:[%s1 + $0x38] sm:$0xf]
    %v76 = vld [vmem:[%s1 + $0x3c] sm:$0xf]
    %v77 = vld [vmem:[%s2] sm:$0x1]
    %v79 = vlaneseq
    %v80 = vshrl.u32 %v79, 7
    %v81 = vsub.s32 0, %v80
    %v82 = vrot.slane %v77, %v81
    %v100 = vunpack.c.l.b16 %v61
    %v101 = vunpack.c.l.b16 %v62
    %v102 = vunpack.c.l.b16 %v63
    %v103 = vunpack.c.l.b16 %v64
    %v104 = vunpack.c.l.b16 %v65
    %v105 = vunpack.c.l.b16 %v66
    %v106 = vunpack.c.l.b16 %v67
    %v107 = vunpack.c.l.b16 %v68
    %v108 = vunpack.c.l.b16 %v69
    %v109 = vunpack.c.l.b16 %v70
    %v110 = vunpack.c.l.b16 %v71
    %v111 = vunpack.c.l.b16 %v72
    %v112 = vunpack.c.l.b16 %v73
    %v113 = vunpack.c.l.b16 %v74
    %v114 = vunpack.c.l.b16 %v75
    %v115 = vunpack.c.l.b16 %v76
    %v116 = vpack.c.b16 %v101, %v100
    %v117 = vpack.c.b16 %v103, %v102
    %v118 = vpack.c.b16 %v105, %v104
    %v119 = vpack.c.b16 %v107, %v106
    %v120 = vpack.c.b16 %v109, %v108
    %v121 = vpack.c.b16 %v111, %v110
    %v122 = vpack.c.b16 %v113, %v112
    %v123 = vpack.c.b16 %v115, %v114
    %132 = vmatprep.subr.bf16.mxu0 0
    %133 = vmatpush1.bf16.msra.mxu0 %v116
    %134 = vmatprep.subr.bf16.mxu0 0
    %135 = vmatpush1.bf16.msra.mxu0 %v117
    %136 = vmatprep.subr.bf16.mxu0 0
    %137 = vmatpush1.bf16.msra.mxu0 %v118
    %138 = vmatprep.subr.bf16.mxu0 0
    %139 = vmatpush1.bf16.msra.mxu0 %v119
    %140 = vmatprep.subr.bf16.mxu0 0
    %141 = vmatpush1.bf16.msra.mxu0 %v120
    %142 = vmatprep.subr.bf16.mxu0 0
    %143 = vmatpush1.bf16.msra.mxu0 %v121
    %144 = vmatprep.subr.bf16.mxu0 0
    %145 = vmatpush1.bf16.msra.mxu0 %v122
    %146 = vmatprep.subr.bf16.mxu0 0
    %147 = vmatpush1.bf16.msra.mxu0 %v123
    %148 = vmatprep.subr.bf16.mxu0 0
    %149 = vmatpush1.bf16.msra.mxu0 0
    %150 = vmatprep.subr.bf16.mxu0 0
    %151 = vmatpush1.bf16.msra.mxu0 0
    %152 = vmatprep.subr.bf16.mxu0 0
    %153 = vmatpush1.bf16.msra.mxu0 0
    %154 = vmatprep.subr.bf16.mxu0 0
    %155 = vmatpush1.bf16.msra.mxu0 0
    %156 = vmatprep.subr.bf16.mxu0 0
    %157 = vmatpush1.bf16.msra.mxu0 0
    %158 = vmatprep.subr.bf16.mxu0 0
    %159 = vmatpush1.bf16.msra.mxu0 0
    %160 = vmatprep.subr.bf16.mxu0 0
    %161 = vmatpush1.bf16.msra.mxu0 0
    %162 = vmatprep.subr.bf16.mxu0 0
    %163 = vmatpush1.bf16.msra.mxu0 0
    %164 = vmatprep.mubr.bf16.mxu0 0
    %165 = vmatmul.mubr.bf16.gmra.mrb[0].mxu0 %v60
    %v166 = vpop.f32.mrb[0].mxu0
    %v167 = vadd.f32 %v82, %v166
    %v168 = vpop.f32.mrb[0].mxu0
    %v169 = vpop.f32.mrb[0].mxu0
    %v170 = vpop.f32.mrb[0].mxu0
    %171 = vdwg.mxu0
    %v172 = vmax.f32 %v167, 0.0
    %v173 = vpack.c.bf16 %v172, %v172
    %v174 = vld [vmem:[#allocation5] sm:$0xf]
    %v175 = vld [vmem:[#allocation5 + $0x4] sm:$0xf]
    %v176 = vld [vmem:[#allocation5 + $0x8] sm:$0xf]
    %v177 = vld [vmem:[#allocation5 + $0xc] sm:$0xf]
    %v178 = vld [vmem:[#allocation5 + $0x10] sm:$0xf]
    %v179 = vld [vmem:[#allocation5 + $0x14] sm:$0xf]
    %v180 = vld [vmem:[#allocation5 + $0x18] sm:$0xf]
    %v181 = vld [vmem:[#allocation5 + $0x1c] sm:$0xf]
    %v182 = vld [vmem:[#allocation5 + $0x20] sm:$0xf]
    %v183 = vld [vmem:[#allocation5 + $0x24] sm:$0xf]
    %v184 = vld [vmem:[#allocation5 + $0x28] sm:$0xf]
    %v185 = vld [vmem:[#allocation5 + $0x2c] sm:$0xf]
    %v186 = vld [vmem:[#allocation5 + $0x30] sm:$0xf]
    %v187 = vld [vmem:[#allocation5 + $0x34] sm:$0xf]
    %v188 = vld [vmem:[#allocation5 + $0x38] sm:$0xf]
    %v189 = vld [vmem:[#allocation5 + $0x3c] sm:$0xf]
    %v190 = vld [vmem:[%s4] sm:$0x1]
    %v192 = vlaneseq
    %v193 = vshrl.u32 %v192, 7
    %v194 = vsub.s32 0, %v193
    %v195 = vrot.slane %v190, %v194
    %v213 = vunpack.c.l.b16 %v174
    %v214 = vunpack.c.l.b16 %v175
    %v215 = vunpack.c.l.b16 %v176
    %v216 = vunpack.c.l.b16 %v177
    %v217 = vunpack.c.l.b16 %v178
    %v218 = vunpack.c.l.b16 %v179
    %v219 = vunpack.c.l.b16 %v180
    %v220 = vunpack.c.l.b16 %v181
    %v221 = vunpack.c.l.b16 %v182
    %v222 = vunpack.c.l.b16 %v183
    %v223 = vunpack.c.l.b16 %v184
    %v224 = vunpack.c.l.b16 %v185
    %v225 = vunpack.c.l.b16 %v186
    %v226 = vunpack.c.l.b16 %v187
    %v227 = vunpack.c.l.b16 %v188
    %v228 = vunpack.c.l.b16 %v189
    %v229 = vpack.c.b16 %v214, %v213
    %v230 = vpack.c.b16 %v216, %v215
    %v231 = vpack.c.b16 %v218, %v217
    %v232 = vpack.c.b16 %v220, %v219
    %v233 = vpack.c.b16 %v222, %v221
    %v234 = vpack.c.b16 %v224, %v223
    %v235 = vpack.c.b16 %v226, %v225
    %v236 = vpack.c.b16 %v228, %v227
    %245 = vmatprep.subr.bf16.mxu0 0
    %246 = vmatpush1.bf16.msra.mxu0 %v229
    %247 = vmatprep.subr.bf16.mxu0 0
    %248 = vmatpush1.bf16.msra.mxu0 %v230
    %249 = vmatprep.subr.bf16.mxu0 0
    %250 = vmatpush1.bf16.msra.mxu0 %v231
    %251 = vmatprep.subr.bf16.mxu0 0
    %252 = vmatpush1.bf16.msra.mxu0 %v232
    %253 = vmatprep.subr.bf16.mxu0 0
    %254 = vmatpush1.bf16.msra.mxu0 %v233
    %255 = vmatprep.subr.bf16.mxu0 0
    %256 = vmatpush1.bf16.msra.mxu0 %v234
    %257 = vmatprep.subr.bf16.mxu0 0
    %258 = vmatpush1.bf16.msra.mxu0 %v235
    %259 = vmatprep.subr.bf16.mxu0 0
    %260 = vmatpush1.bf16.msra.mxu0 %v236
    %261 = vmatprep.subr.bf16.mxu0 0
    %262 = vmatpush1.bf16.msra.mxu0 0
    %263 = vmatprep.subr.bf16.mxu0 0
    %264 = vmatpush1.bf16.msra.mxu0 0
    %265 = vmatprep.subr.bf16.mxu0 0
    %266 = vmatpush1.bf16.msra.mxu0 0
    %267 = vmatprep.subr.bf16.mxu0 0
    %268 = vmatpush1.bf16.msra.mxu0 0
    %269 = vmatprep.subr.bf16.mxu0 0
    %270 = vmatpush1.bf16.msra.mxu0 0
    %271 = vmatprep.subr.bf16.mxu0 0
    %272 = vmatpush1.bf16.msra.mxu0 0
    %273 = vmatprep.subr.bf16.mxu0 0
    %274 = vmatpush1.bf16.msra.mxu0 0
    %275 = vmatprep.subr.bf16.mxu0 0
    %276 = vmatpush1.bf16.msra.mxu0 0
    %277 = vmatprep.mubr.bf16.mxu0 0
    %278 = vmatmul.mubr.bf16.gmra.mrb[0].mxu0 %v173
    %v279 = vpop.f32.mrb[0].mxu0
    %v280 = vadd.f32 %v195, %v279
    %v281 = vpop.f32.mrb[0].mxu0
    %v282 = vpop.f32.mrb[0].mxu0
    %v283 = vpop.f32.mrb[0].mxu0
    %284 = vdwg.mxu0
    %v285 = vmax.f32 %v280, 0.0
    %v286 = vpack.c.bf16 %v285, %v285
    %v287 = vld [vmem:[%s5] sm:$0xf]
    %v288 = vld [vmem:[%s5 + $0x4] sm:$0xf]
    %v289 = vld [vmem:[%s5 + $0x8] sm:$0xf]
    %v290 = vld [vmem:[%s5 + $0xc] sm:$0xf]
    %v291 = vld [vmem:[%s5 + $0x10] sm:$0xf]
    %v292 = vld [vmem:[%s5 + $0x14] sm:$0xf]
    %v293 = vld [vmem:[%s5 + $0x18] sm:$0xf]
    %v294 = vld [vmem:[%s5 + $0x1c] sm:$0xf]
    %v295 = vld [vmem:[%s5 + $0x20] sm:$0xf]
    %v296 = vld [vmem:[%s5 + $0x24] sm:$0xf]
    %v297 = vld [vmem:[%s5 + $0x28] sm:$0xf]
    %v298 = vld [vmem:[%s5 + $0x2c] sm:$0xf]
    %v299 = vld [vmem:[%s5 + $0x30] sm:$0xf]
    %v300 = vld [vmem:[%s5 + $0x34] sm:$0xf]
    %v301 = vld [vmem:[%s5 + $0x38] sm:$0xf]
    %v302 = vld [vmem:[%s5 + $0x3c] sm:$0xf]
    %v303 = vld [vmem:[%s6] sm:$0x1]
    %v305 = vlaneseq
    %v306 = vshrl.u32 %v305, 7
    %v307 = vsub.s32 0, %v306
    %v308 = vrot.slane %v303, %v307
    %v326 = vunpack.c.l.b16 %v287
    %v327 = vunpack.c.l.b16 %v288
    %v328 = vunpack.c.l.b16 %v289
    %v329 = vunpack.c.l.b16 %v290
    %v330 = vunpack.c.l.b16 %v291
    %v331 = vunpack.c.l.b16 %v292
    %v332 = vunpack.c.l.b16 %v293
    %v333 = vunpack.c.l.b16 %v294
    %v334 = vunpack.c.l.b16 %v295
    %v335 = vunpack.c.l.b16 %v296
    %v336 = vunpack.c.l.b16 %v297
    %v337 = vunpack.c.l.b16 %v298
    %v338 = vunpack.c.l.b16 %v299
    %v339 = vunpack.c.l.b16 %v300
    %v340 = vunpack.c.l.b16 %v301
    %v341 = vunpack.c.l.b16 %v302
    %v342 = vpack.c.b16 %v327, %v326
    %v343 = vpack.c.b16 %v329, %v328
    %v344 = vpack.c.b16 %v331, %v330
    %v345 = vpack.c.b16 %v333, %v332
    %v346 = vpack.c.b16 %v335, %v334
    %v347 = vpack.c.b16 %v337, %v336
    %v348 = vpack.c.b16 %v339, %v338
    %v349 = vpack.c.b16 %v341, %v340
    %358 = vmatprep.subr.bf16.mxu0 0
    %359 = vmatpush1.bf16.msra.mxu0 %v342
    %360 = vmatprep.subr.bf16.mxu0 0
    %361 = vmatpush1.bf16.msra.mxu0 %v343
    %362 = vmatprep.subr.bf16.mxu0 0
    %363 = vmatpush1.bf16.msra.mxu0 %v344
    %364 = vmatprep.subr.bf16.mxu0 0
    %365 = vmatpush1.bf16.msra.mxu0 %v345
    %366 = vmatprep.subr.bf16.mxu0 0
    %367 = vmatpush1.bf16.msra.mxu0 %v346
    %368 = vmatprep.subr.bf16.mxu0 0
    %369 = vmatpush1.bf16.msra.mxu0 %v347
    %370 = vmatprep.subr.bf16.mxu0 0
    %371 = vmatpush1.bf16.msra.mxu0 %v348
    %372 = vmatprep.subr.bf16.mxu0 0
    %373 = vmatpush1.bf16.msra.mxu0 %v349
    %374 = vmatprep.subr.bf16.mxu0 0
    %375 = vmatpush1.bf16.msra.mxu0 0
    %376 = vmatprep.subr.bf16.mxu0 0
    %377 = vmatpush1.bf16.msra.mxu0 0
    %378 = vmatprep.subr.bf16.mxu0 0
    %379 = vmatpush1.bf16.msra.mxu0 0
    %380 = vmatprep.subr.bf16.mxu0 0
    %381 = vmatpush1.bf16.msra.mxu0 0
    %382 = vmatprep.subr.bf16.mxu0 0
    %383 = vmatpush1.bf16.msra.mxu0 0
    %384 = vmatprep.subr.bf16.mxu0 0
    %385 = vmatpush1.bf16.msra.mxu0 0
    %386 = vmatprep.subr.bf16.mxu0 0
    %387 = vmatpush1.bf16.msra.mxu0 0
    %388 = vmatprep.subr.bf16.mxu0 0
    %389 = vmatpush1.bf16.msra.mxu0 0
    %390 = vmatprep.mubr.bf16.mxu0 0
    %391 = vmatmul.mubr.bf16.gmra.mrb[0].mxu0 %v286
    %v392 = vpop.f32.mrb[0].mxu0
    %v393 = vadd.f32 %v308, %v392
    %v394 = vpop.f32.mrb[0].mxu0
    %v395 = vpop.f32.mrb[0].mxu0
    %v396 = vpop.f32.mrb[0].mxu0
    %397 = vdwg.mxu0
    %v398 = vmax.f32 %v393, 0.0
    %v399 = vpack.c.bf16 %v398, %v398
    %v400 = vld [vmem:[%s7] sm:$0xf]
    %v401 = vld [vmem:[%s7 + $0x4] sm:$0xf]
    %v402 = vld [vmem:[%s7 + $0x8] sm:$0xf]
    %v403 = vld [vmem:[%s7 + $0xc] sm:$0xf]
    %v404 = vld [vmem:[%s7 + $0x10] sm:$0xf]
    %v405 = vld [vmem:[%s7 + $0x14] sm:$0xf]
    %v406 = vld [vmem:[%s7 + $0x18] sm:$0xf]
    %v407 = vld [vmem:[%s7 + $0x1c] sm:$0xf]
    %v408 = vld [vmem:[%s8] sm:$0x1]
    %v410 = vlaneseq
    %v411 = vshrl.u32 %v410, 7
    %v412 = vsub.s32 0, %v411
    %v413 = vrot.slane %v408, %v412
    %v423 = vunpack.c.l.b16 %v400
    %v424 = vunpack.c.l.b16 %v401
    %v425 = vunpack.c.l.b16 %v402
    %v426 = vunpack.c.l.b16 %v403
    %v427 = vunpack.c.l.b16 %v404
    %v428 = vunpack.c.l.b16 %v405
    %v429 = vunpack.c.l.b16 %v406
    %v430 = vunpack.c.l.b16 %v407
    %v431 = vpack.c.b16 %v424, %v423
    %v432 = vpack.c.b16 %v426, %v425
    %v433 = vpack.c.b16 %v428, %v427
    %v434 = vpack.c.b16 %v430, %v429
    %vm439 = vcmask 523264
    %v441 = vsel %vm439, %v399, 0
    %443 = vmatprep.subr.bf16.mxu0 0
    %444 = vmatpush1.bf16.msra.mxu0 %v431
    %445 = vmatprep.subr.bf16.mxu0 0
    %446 = vmatpush1.bf16.msra.mxu0 %v432
    %447 = vmatprep.subr.bf16.mxu0 0
    %448 = vmatpush1.bf16.msra.mxu0 %v433
    %449 = vmatprep.subr.bf16.mxu0 0
    %450 = vmatpush1.bf16.msra.mxu0 %v434
    %451 = vmatprep.subr.bf16.mxu0 0
    %452 = vmatpush1.bf16.msra.mxu0 0
    %453 = vmatprep.subr.bf16.mxu0 0
    %454 = vmatpush1.bf16.msra.mxu0 0
    %455 = vmatprep.subr.bf16.mxu0 0
    %456 = vmatpush1.bf16.msra.mxu0 0
    %457 = vmatprep.subr.bf16.mxu0 0
    %458 = vmatpush1.bf16.msra.mxu0 0
    %459 = vmatprep.subr.bf16.mxu0 0
    %460 = vmatpush1.bf16.msra.mxu0 0
    %461 = vmatprep.subr.bf16.mxu0 0
    %462 = vmatpush1.bf16.msra.mxu0 0
    %463 = vmatprep.subr.bf16.mxu0 0
    %464 = vmatpush1.bf16.msra.mxu0 0
    %465 = vmatprep.subr.bf16.mxu0 0
    %466 = vmatpush1.bf16.msra.mxu0 0
    %467 = vmatprep.subr.bf16.mxu0 0
    %468 = vmatpush1.bf16.msra.mxu0 0
    %469 = vmatprep.subr.bf16.mxu0 0
    %470 = vmatpush1.bf16.msra.mxu0 0
    %471 = vmatprep.subr.bf16.mxu0 0
    %472 = vmatpush1.bf16.msra.mxu0 0
    %473 = vmatprep.subr.bf16.mxu0 0
    %474 = vmatpush1.bf16.msra.mxu0 0
    %475 = vmatprep.mubr.bf16.mxu0 0
    %476 = vmatmul.mubr.bf16.gmra.mrb[0].mxu0 %v441
    %v477 = vpop.f32.mrb[0].mxu0
    %v478 = vadd.f32 %v413, %v477
    %v479 = vpop.f32.mrb[0].mxu0
    %v480 = vpop.f32.mrb[0].mxu0
    %v481 = vpop.f32.mrb[0].mxu0
    %482 = vdwg.mxu0
    %483 = vst [vmem:[#allocation7] sm:$0xff] %v478
    // Predicated region
    $region46: #{tpu_custom_call.1} parent=1 // pred_check
      _
    $region47: #{tpu_custom_call.1} parent=1 // pred_check_branch
      %485 = sbr.rel (0) target = $region49
    $region48: #{tpu_custom_call.1} parent=1 // pred_region
      %s487 = ssub.s32 128, 128
      %488 = vsyncadd [#allocation4], %s487
      %s490 = sshll.u32 [#allocation7], 4
      %s491 = int_to_ptr.vmem [resolvable:$true] %s490
      %493 = dma.vmem_to_hbm [thread:$0]  %s491, 128, %s9, [#allocation4]
    $region49: #{tpu_custom_call.1} parent=1 // pred_fallthru
      _
    // Predicated region
    $region50: #{tpu_custom_call.1} parent=1 // pred_check
      _
    $region51: #{tpu_custom_call.1} parent=1 // pred_check_branch
      %495 = sbr.rel (0) target = $region53
    $region52: #{tpu_custom_call.1} parent=1 // pred_region
      %496 = dma.done [#allocation4], 128
    $region53: #{tpu_custom_call.1} parent=1 // pred_fallthru
      _
    %497 = vsyncpa [#allocation3], 1
    %498 = vsyncpa [#allocation6], 1
    %499 = vsyncpa [#allocation4], 1

</llo_original>
